<compile_context>
chip_gen: v7x
topology: tpu7x:2x2x1
jax: 0.10.0
libtpu: 0.0.40
codegen_flags: <defaults>
</compile_context>

<pallas_src>
import jax
import jax.numpy as jnp
from jax.experimental import pallas as pl
from jax.experimental.pallas import tpu as pltpu


# ---------------------------------------------------------------------------
# k-means regularization loss
# ---------------------------------------------------------------------------
def kmeans_loss_kernel(h_ref, f_ref, loss_ref, htf_acc, ssq_acc):
    step = pl.program_id(0)

    @pl.when(step == 0)
    def _init():
        htf_acc[...] = jnp.zeros_like(htf_acc)
        ssq_acc[...] = jnp.zeros_like(ssq_acc)

    h = h_ref[...]                       # (TN, D), native dtype
    f = f_ref[...]                       # (TN, K), native dtype

    # Partial h^T @ F: contract the N (row) axis of both operands on the MXU,
    # no explicit .T, accumulate in f32.
    htf_acc[...] += jax.lax.dot_general(
        h, f,
        dimension_numbers=(((0,), (0,)), ((), ())),
        preferred_element_type=jnp.float32)

    # Partial trace(h h^T) = sum(h * h); elementwise work in f32 on the VPU.
    h32 = h.astype(jnp.float32)
    ssq_acc[...] += jnp.sum(h32 * h32)

    @pl.when(step == pl.num_programs(0) - 1)
    def _finalize():
        htf = htf_acc[...]
        # loss = sum(h*h) - ||h^T F||_F^2
        loss_ref[0, 0] = jnp.sum(ssq_acc[...]) - jnp.sum(htf * htf)


def kmeans_loss(h_real, F, *, block_n=512):
    """Scalar k-means loss: trace(h h^T) - trace(F^T (h h^T) F).

    h_real: (N, D); F: (N, K).  N is tiled into `block_n`-row chunks (reduction
    grid axis).  Zero-padding rows contribute nothing to either term, so any N
    is supported.
    """
    N, D = h_real.shape
    NF, K = F.shape
    assert N == NF, (h_real.shape, F.shape)

    tn = min(block_n, N)
    if tn < N:
        tn = max(8, (tn // 8) * 8)        # sublane-aligned contraction tiles
    pad = (-N) % tn
    if pad:
        h_real = jnp.pad(h_real, ((0, pad), (0, 0)))
        F = jnp.pad(F, ((0, pad), (0, 0)))
    n_steps = (N + pad) // tn

    out = pl.pallas_call(
        kmeans_loss_kernel,
        out_shape=jax.ShapeDtypeStruct((1, 1), jnp.float32),
        grid_spec=pltpu.PrefetchScalarGridSpec(
            num_scalar_prefetch=0,
            grid=(n_steps,),
            in_specs=[
                pl.BlockSpec((tn, D), lambda i: (i, 0)),
                pl.BlockSpec((tn, K), lambda i: (i, 0)),
            ],
            out_specs=pl.BlockSpec(memory_space=pltpu.MemorySpace.SMEM),
            scratch_shapes=[
                pltpu.VMEM((D, K), jnp.float32),   # h^T F accumulator
                pltpu.VMEM((1, 1), jnp.float32),   # running sum(h * h)
            ],
        ),
        compiler_params=pltpu.CompilerParams(
            dimension_semantics=("arbitrary",),    # pure reduction over N
        ),
    )(h_real, F)
    # TODO(synk): on v7x, shard the N-reduction across the 2 TensorCores
    # (parallel leading axis + partial-sum combine) instead of one arbitrary axis.
    return out[0, 0]


# ---------------------------------------------------------------------------
# DEC head: cosine similarity -> soft assignment Q -> target distribution P
# (ClusterNet2.forward after the encoder; alpha_ = 1.0 so power = 1)
# ---------------------------------------------------------------------------
def dec_head_kernel(z_ref, c_ref, q_ref, p_ref):
    eps = jnp.float32(1e-8)
    z = z_ref[...].astype(jnp.float32)    # (N, D) latent features ("aa")
    c = c_ref[...].astype(jnp.float32)    # (K, D) cluster centers

    # cosine similarity (torch.nn.CosineSimilarity over the feature axis)
    zn = z / jnp.maximum(jnp.sqrt(jnp.sum(z * z, axis=-1, keepdims=True)), eps)
    cn = c / jnp.maximum(jnp.sqrt(jnp.sum(c * c, axis=-1, keepdims=True)), eps)
    sim = jax.lax.dot_general(            # (N, K); contract feature axis, no .T
        zn, cn, dimension_numbers=(((1,), (1,)), ((), ())),
        preferred_element_type=jnp.float32)

    # numerator = (1 / (1 + sim/alpha)) ** ((alpha+1)/2) with alpha = 1 -> power = 1
    num = 1.0 / (1.0 + sim)
    q = num / jnp.sum(num, axis=-1, keepdims=True)

    # target distribution P (Xie/Girshick/Farhadi eq. 3)
    w = (q * q) / jnp.sum(q, axis=0, keepdims=True)
    p = w / jnp.sum(w, axis=-1, keepdims=True)

    q_ref[...] = q
    p_ref[...] = p


def dec_head(z, cluster_centers):
    """Returns (Q, P) for latent features z (N, D) and centers (K, D)."""
    N, D = z.shape
    K, Dc = cluster_centers.shape
    assert D == Dc, (z.shape, cluster_centers.shape)
    # P needs column sums over the whole batch -> keep everything resident
    # (shapes here are tiny).  TODO(synk): tile over N for very large batches.
    return pl.pallas_call(
        dec_head_kernel,
        out_shape=(jax.ShapeDtypeStruct((N, K), jnp.float32),
                   jax.ShapeDtypeStruct((N, K), jnp.float32)),
        in_specs=[
            pl.BlockSpec(memory_space=pltpu.MemorySpace.VMEM),
            pl.BlockSpec(memory_space=pltpu.MemorySpace.VMEM),
        ],
        out_specs=(
            pl.BlockSpec(memory_space=pltpu.MemorySpace.VMEM),
            pl.BlockSpec(memory_space=pltpu.MemorySpace.VMEM),
        ),
    )(z, cluster_centers)


# ---------------------------------------------------------------------------
# helpers / pure-JAX references
# ---------------------------------------------------------------------------
def make_orthogonal(key, rows, cols):
    """Deterministic stand-in for torch.nn.init.orthogonal_ (QR of a gaussian)."""
    a = jax.random.normal(key, (rows, cols), dtype=jnp.float32)
    q, r = jnp.linalg.qr(a)
    return q * jnp.sign(jnp.diagonal(r))[None, :]


def kmeans_loss_ref(h, F):
    wtw = jnp.dot(h, h.T, precision="highest")
    ftwtwf = jnp.dot(jnp.dot(F.T, wtw, precision="highest"), F, precision="highest")
    return jnp.trace(wtw) - jnp.trace(ftwtwf)


def dec_head_ref(z, c, eps=1e-8):
    zn = z / jnp.maximum(jnp.linalg.norm(z, axis=-1, keepdims=True), eps)
    cn = c / jnp.maximum(jnp.linalg.norm(c, axis=-1, keepdims=True), eps)
    sim = jnp.dot(zn, cn.T, precision="highest")
    num = 1.0 / (1.0 + sim)
    q = num / jnp.sum(num, axis=-1, keepdims=True)
    w = q ** 2 / jnp.sum(q, axis=0)
    p = (w.T / jnp.sum(w, axis=1)).T
    return q, p


if __name__ == "__main__":
    # Shapes implied by the module: aa = emb.reshape(-1, 10) (hidden = 10),
    # n_clusters = 6, N = batch_size * timeseries.
    batch_size, timeseries, hidden, n_clusters = 2, 8, 10, 6
    N = batch_size * timeseries

    key = jax.random.PRNGKey(0)
    k_h, k_f, k_c, k_h2, k_f2 = jax.random.split(key, 5)

    h_real = jax.random.normal(k_h, (N, hidden), dtype=jnp.float32)        # "aa"
    F = make_orthogonal(k_f, N, n_clusters)                                # kmeans.F
    centers = 0.5 * jax.random.normal(k_c, (n_clusters, hidden), jnp.float32)

    loss = kmeans_loss(h_real, F)
    q, p = dec_head(h_real, centers)
    jax.block_until_ready((loss, q, p))

    loss_ref = kmeans_loss_ref(h_real, F)
    q_ref, p_ref = dec_head_ref(h_real, centers)
    assert jnp.allclose(loss, loss_ref, rtol=1e-4, atol=1e-3), (loss, loss_ref)
    assert jnp.allclose(q, q_ref, rtol=1e-4, atol=1e-4), "Q mismatch"
    assert jnp.allclose(p, p_ref, rtol=1e-4, atol=1e-4), "P mismatch"

    # Second check: larger N exercises the multi-step reduction grid
    # (4 steps of 256 rows) and the accumulator init/finalize path.
    N2 = 1024
    h2 = jax.random.normal(k_h2, (N2, hidden), dtype=jnp.float32)
    F2 = make_orthogonal(k_f2, N2, n_clusters)
    loss2 = kmeans_loss(h2, F2, block_n=256)
    jax.block_until_ready(loss2)
    loss2_ref = kmeans_loss_ref(h2, F2)
    assert jnp.allclose(loss2, loss2_ref, rtol=1e-4, atol=1e-2), (loss2, loss2_ref)

    print("KERNEL_OK")
</pallas_src>

<mosaic_0001>
module attributes {stable_mosaic.version = 11 : i64} {
  func.func @kmeans_loss_kernel(%arg0: i32, %arg1: memref<16x10xf32, #tpu.memory_space<vmem>>, %arg2: memref<16x6xf32, #tpu.memory_space<vmem>>, %arg3: memref<1x1xf32, #tpu.memory_space<smem>>, %arg4: memref<10x6xf32, #tpu.memory_space<vmem>>, %arg5: memref<1x1xf32, #tpu.memory_space<vmem>>) attributes {dimension_semantics = [#tpu.dimension_semantics<arbitrary>], iteration_bounds = array<i64: 1>, scalar_prefetch = 0 : i64, scratch_operands = 2 : i64, tpu.core_type = #tpu.core_type<tc>, window_params = [{transform_indices = @transform_0, window_bounds = array<i64: 16, 10>}, {transform_indices = @transform_1, window_bounds = array<i64: 16, 6>}, {transform_indices = @transform_2, window_bounds = array<i64: 1, 1>}]} {
    %c0_i32 = arith.constant 0 : i32
    %0 = arith.cmpi eq, %arg0, %c0_i32 : i32
    %1 = arith.extui %0 : i1 to i32
    %c0_i32_0 = arith.constant 0 : i32
    %2 = arith.cmpi ne, %1, %c0_i32_0 : i32
    scf.if %2 {
      %cst_15 = arith.constant 0.000000e+00 : f32
      %21 = vector.broadcast %cst_15 : f32 to vector<10x6xf32>
      %c0_16 = arith.constant 0 : index
      %c0_17 = arith.constant 0 : index
      %22 = vector.load %arg4[%c0_16, %c0_17] : memref<10x6xf32, #tpu.memory_space<vmem>>, vector<10x6xf32>
      tpu.vector_store %arg4[%c0_16, %c0_17], %21 {strides = array<i32>} : memref<10x6xf32, #tpu.memory_space<vmem>>, vector<10x6xf32>,
      %cst_18 = arith.constant 0.000000e+00 : f32
      %23 = vector.broadcast %cst_18 : f32 to vector<1x1xf32>
      %c0_19 = arith.constant 0 : index
      %c0_20 = arith.constant 0 : index
      %24 = vector.load %arg5[%c0_19, %c0_20] : memref<1x1xf32, #tpu.memory_space<vmem>>, vector<1x1xf32>
      tpu.vector_store %arg5[%c0_19, %c0_20], %23 {strides = array<i32>} : memref<1x1xf32, #tpu.memory_space<vmem>>, vector<1x1xf32>,
    } else {
    }
    %c0 = arith.constant 0 : index
    %c0_1 = arith.constant 0 : index
    %3 = vector.load %arg1[%c0, %c0_1] : memref<16x10xf32, #tpu.memory_space<vmem>>, vector<16x10xf32>
    %c0_2 = arith.constant 0 : index
    %c0_3 = arith.constant 0 : index
    %4 = vector.load %arg2[%c0_2, %c0_3] : memref<16x6xf32, #tpu.memory_space<vmem>>, vector<16x6xf32>
    %c0_4 = arith.constant 0 : index
    %c0_5 = arith.constant 0 : index
    %5 = vector.load %arg4[%c0_4, %c0_5] : memref<10x6xf32, #tpu.memory_space<vmem>>, vector<10x6xf32>
    %cst = arith.constant dense<0.000000e+00> : vector<10x6xf32>
    %6 = tpu.matmul %3, %4, %cst {dimension_numbers = #tpu.dot_dimension_numbers<[0], [0], [1], [1], [0, 1, 1, 1], [], []>} : vector<16x10xf32>, vector<16x6xf32>, vector<10x6xf32> -> vector<10x6xf32>
    %7 = arith.addf %5, %6 : vector<10x6xf32>
    %c0_6 = arith.constant 0 : index
    %c0_7 = arith.constant 0 : index
    %8 = vector.load %arg4[%c0_6, %c0_7] : memref<10x6xf32, #tpu.memory_space<vmem>>, vector<10x6xf32>
    tpu.vector_store %arg4[%c0_6, %c0_7], %7 {strides = array<i32>} : memref<10x6xf32, #tpu.memory_space<vmem>>, vector<10x6xf32>,
    %c0_8 = arith.constant 0 : index
    %c0_9 = arith.constant 0 : index
    %9 = vector.load %arg5[%c0_8, %c0_9] : memref<1x1xf32, #tpu.memory_space<vmem>>, vector<1x1xf32>
    %10 = arith.mulf %3, %3 : vector<16x10xf32>
    %11 = vector.shape_cast %10 : vector<16x10xf32> to vector<1x16x10xf32>
    %cst_10 = arith.constant dense<0.000000e+00> : vector<1xf32>
    %12 = vector.multi_reduction <add>, %11, %cst_10 [1, 2] : vector<1x16x10xf32> to vector<1xf32>
    %13 = vector.shape_cast %12 : vector<1xf32> to vector<1x1x1xf32>
    %14 = vector.extract %13[0, 0, 0] : f32 from vector<1x1x1xf32>
    %15 = vector.broadcast %14 : f32 to vector<1x1xf32>
    %16 = arith.addf %9, %15 : vector<1x1xf32>
    %c0_11 = arith.constant 0 : index
    %c0_12 = arith.constant 0 : index
    %17 = vector.load %arg5[%c0_11, %c0_12] : memref<1x1xf32, #tpu.memory_space<vmem>>, vector<1x1xf32>
    tpu.vector_store %arg5[%c0_11, %c0_12], %16 {strides = array<i32>} : memref<1x1xf32, #tpu.memory_space<vmem>>, vector<1x1xf32>,
    %c0_i32_13 = arith.constant 0 : i32
    %18 = arith.cmpi eq, %arg0, %c0_i32_13 : i32
    %19 = arith.extui %18 : i1 to i32
    %c0_i32_14 = arith.constant 0 : i32
    %20 = arith.cmpi ne, %19, %c0_i32_14 : i32
    scf.if %20 {
      %c0_15 = arith.constant 0 : index
      %c0_16 = arith.constant 0 : index
      %21 = vector.load %arg4[%c0_15, %c0_16] : memref<10x6xf32, #tpu.memory_space<vmem>>, vector<10x6xf32>
      %c0_17 = arith.constant 0 : index
      %c0_18 = arith.constant 0 : index
      %22 = vector.load %arg5[%c0_17, %c0_18] : memref<1x1xf32, #tpu.memory_space<vmem>>, vector<1x1xf32>
      %23 = vector.shape_cast %22 : vector<1x1xf32> to vector<1x1x1xf32>
      %cst_19 = arith.constant dense<0.000000e+00> : vector<1xf32>
      %24 = vector.multi_reduction <add>, %23, %cst_19 [1, 2] : vector<1x1x1xf32> to vector<1xf32>
      %25 = vector.shape_cast %24 : vector<1xf32> to vector<1x1x1xf32>
      %26 = vector.extract %25[0, 0, 0] : f32 from vector<1x1x1xf32>
      %27 = arith.mulf %21, %21 : vector<10x6xf32>
      %28 = vector.shape_cast %27 : vector<10x6xf32> to vector<1x10x6xf32>
      %cst_20 = arith.constant dense<0.000000e+00> : vector<1xf32>
      %29 = vector.multi_reduction <add>, %28, %cst_20 [1, 2] : vector<1x10x6xf32> to vector<1xf32>
      %30 = vector.shape_cast %29 : vector<1xf32> to vector<1x1x1xf32>
      %31 = vector.extract %30[0, 0, 0] : f32 from vector<1x1x1xf32>
      %32 = arith.subf %26, %31 : f32
      %c0_21 = arith.constant 0 : index
      %c0_22 = arith.constant 0 : index
      %33 = memref.load %arg3[%c0_21, %c0_22] : memref<1x1xf32, #tpu.memory_space<smem>>
      memref.store %32, %arg3[%c0_21, %c0_22] : memref<1x1xf32, #tpu.memory_space<smem>>
    } else {
    }
    return
  }
  func.func @transform_0(%arg0: i32) -> (i32, i32) {
    %c0_i32 = arith.constant 0 : i32
    %c0_i32_0 = arith.constant 0 : i32
    return %arg0, %c0_i32 : i32, i32
  }
  func.func @transform_1(%arg0: i32) -> (i32, i32) {
    %c0_i32 = arith.constant 0 : i32
    %c0_i32_0 = arith.constant 0 : i32
    return %arg0, %c0_i32 : i32, i32
  }
  func.func @transform_2(%arg0: i32) -> (i32, i32) {
    %c0_i32 = arith.constant 0 : i32
    %c0_i32_0 = arith.constant 0 : i32
    %c0_i32_1 = arith.constant 0 : i32
    return %c0_i32, %c0_i32_0 : i32, i32
  }
}

</mosaic_0001>

<llo_original>
// kernel: tpu_custom_call.1
$region0: #{tpu_custom_call.1}
  #allocation0 [shape = 'u32[]', space=smem, size = 0x4, offset = 0x4, fixed_abs, tag = 'smem constant byte address 0x4 - core index']
  #allocation1 [shape = 'u32[144,128]{1,0:T(1,128)}', space=vmem, size = 0x12000, scoped, tag = 'internal scratch']
  #allocation2 [shape = 'f32[10,6]{1,0:T(8,128)}', space=vmem, size = 0x2000, scoped, tag = 'scratch operand']
  #allocation3 [shape = 'f32[1,1]{1,0:T(1,128)}', space=vmem, size = 0x200, scoped, tag = 'scratch operand']
  %s0 = inlined_call_operand.vmem [shape: f32[16,10], index: 0, kind: input, shape index: {}]
  %s1 = inlined_call_operand.vmem [shape: f32[16,6], index: 1, kind: input, shape index: {}]
  %s2 = inlined_call_operand.hbm [shape: f32[1,1], index: 2, kind: output, shape index: {}]
  %s3 = sld [smem:[#allocation0]]
  $region26: #{tpu_custom_call.1} parent=0
    _
  %s5 = ssub.s32 1, %s3
  %s6 = scalar_select 0, %s5, %s3
  $region1: #{tpu_custom_call.1} parent=0
    #allocation4 [shape = 'u8[512]{0}', space=smem, size = 0x200, scoped, tag = 'output window, operand 0, single buffered']
    #allocation5 [shape = 's32[1]{0}', space=sflag, size = 0x4, scoped, tag = 'scoped memory for tpu_custom_call.1']
    %7 = vsyncpa [#allocation5], 0
    // Predicated region
    $region2: #{tpu_custom_call.1} parent=1 // pred_check
      _
    $region3: #{tpu_custom_call.1} parent=1 // pred_check_branch
      %9 = sbr.rel (0) target = $region5
    $region4: #{tpu_custom_call.1} parent=1 // pred_region
      _
    $region5: #{tpu_custom_call.1} parent=1 // pred_fallthru
      _
    // Predicated region
    $region6: #{tpu_custom_call.1} parent=1 // pred_check
      _
    $region7: #{tpu_custom_call.1} parent=1 // pred_check_branch
      %11 = sbr.rel (0) target = $region9
    $region8: #{tpu_custom_call.1} parent=1 // pred_region
      _
    $region9: #{tpu_custom_call.1} parent=1 // pred_fallthru
      _
    %p12 = scmp.eq.s32.totalorder 0, 0
    // Predicated region
    $region10: #{tpu_custom_call.1} parent=1 // pred_check
      %p13 = pneg %p12
    $region11: #{tpu_custom_call.1} parent=1 // pred_check_branch
      %15 = sbr.rel (%p13) target = $region13
    $region12: #{tpu_custom_call.1} parent=1 // pred_region
      %vm16 = vcmask 48128
      %17 = vst.msk [vmem:[#allocation2] sm:$0xff] %vm16, 0.0
      %vm18 = vcmask 41984
      %19 = vst.msk [vmem:[#allocation2 + $0x8] sm:$0x3] %vm18, 0.0
      %vm20 = vcmask 0
      %21 = vst.msk [vmem:[#allocation3] sm:$0x1] %vm20, 0.0
    $region13: #{tpu_custom_call.1} parent=1 // pred_fallthru
      _
    %v22 = vld [vmem:[%s0] sm:$0xff]
    %v23 = vld [vmem:[%s0 + $0x8] sm:$0xff]
    %v24 = vld [vmem:[%s1] sm:$0xff]
    %v25 = vld [vmem:[%s1 + $0x8] sm:$0xff]
    %v26 = vld [vmem:[#allocation2] sm:$0xff]
    %v27 = vld [vmem:[#allocation2 + $0x8] sm:$0x3]
    %28 = vxpose.xlu0.b32.start [1/16] %v22, 128
    %29 = vxpose.xlu0.b32.cont [2/16] %v23, 128
    %30 = vxpose.xlu0.b32.cont [3/16] 0.0, 128
    %31 = vxpose.xlu0.b32.cont [4/16] 0.0, 128
    %32 = vxpose.xlu0.b32.cont [5/16] 0.0, 128
    %33 = vxpose.xlu0.b32.cont [6/16] 0.0, 128
    %34 = vxpose.xlu0.b32.cont [7/16] 0.0, 128
    %35 = vxpose.xlu0.b32.cont [8/16] 0.0, 128
    %36 = vxpose.xlu0.b32.cont [9/16] 0.0, 128
    %37 = vxpose.xlu0.b32.cont [10/16] 0.0, 128
    %38 = vxpose.xlu0.b32.cont [11/16] 0.0, 128
    %39 = vxpose.xlu0.b32.cont [12/16] 0.0, 128
    %40 = vxpose.xlu0.b32.cont [13/16] 0.0, 128
    %41 = vxpose.xlu0.b32.cont [14/16] 0.0, 128
    %42 = vxpose.xlu0.b32.cont [15/16] 0.0, 128
    %43 = vxpose.xlu0.b32.end [16/16] 0.0, 128
    %v44 = vpop.trf.xlu0
    %v45 = vpop.trf.xlu0
    %v46 = vpop.trf.xlu0
    %v47 = vpop.trf.xlu0
    %v48 = vpop.trf.xlu0
    %v49 = vpop.trf.xlu0
    %v50 = vpop.trf.xlu0
    %v51 = vpop.trf.xlu0
    %v52 = vpop.trf.xlu0
    %v53 = vpop.trf.xlu0
    %v54 = vpop.trf.xlu0
    %v55 = vpop.trf.xlu0
    %v56 = vpop.trf.xlu0
    %v57 = vpop.trf.xlu0
    %v58 = vpop.trf.xlu0
    %v59 = vpop.trf.xlu0
    %vm60 = vcmask 130048
    %v62 = vsel %vm60, %v44, 0
    %v65 = vsel %vm60, %v45, 0
    %67 = vmatprep.subr.mxu0 0.0
    %68 = vmatpush1.msra.mxu0 %v24
    %69 = vmatprep.subr.mxu0 0.0
    %70 = vmatpush1.msra.mxu0 %v25
    %71 = vmatprep.subr.mxu0 0.0
    %72 = vmatpush1.msra.mxu0 0.0
    %73 = vmatprep.subr.mxu0 0.0
    %74 = vmatpush1.msra.mxu0 0.0
    %75 = vmatprep.subr.mxu0 0.0
    %76 = vmatpush1.msra.mxu0 0.0
    %77 = vmatprep.subr.mxu0 0.0
    %78 = vmatpush1.msra.mxu0 0.0
    %79 = vmatprep.subr.mxu0 0.0
    %80 = vmatpush1.msra.mxu0 0.0
    %81 = vmatprep.subr.mxu0 0.0
    %82 = vmatpush1.msra.mxu0 0.0
    %83 = vmatprep.subr.mxu0 0.0
    %84 = vmatpush1.msra.mxu0 0.0
    %85 = vmatprep.subr.mxu0 0.0
    %86 = vmatpush1.msra.mxu0 0.0
    %87 = vmatprep.subr.mxu0 0.0
    %88 = vmatpush1.msra.mxu0 0.0
    %89 = vmatprep.subr.mxu0 0.0
    %90 = vmatpush1.msra.mxu0 0.0
    %91 = vmatprep.subr.mxu0 0.0
    %92 = vmatpush1.msra.mxu0 0.0
    %93 = vmatprep.subr.mxu0 0.0
    %94 = vmatpush1.msra.mxu0 0.0
    %95 = vmatprep.subr.mxu0 0.0
    %96 = vmatpush1.msra.mxu0 0.0
    %97 = vmatprep.subr.mxu0 0.0
    %98 = vmatpush1.msra.mxu0 0.0
    %99 = vmatprep.subr.mxu0 0.0
    %100 = vmatpush1.msra.mxu0 0.0
    %101 = vmatprep.subr.mxu0 0.0
    %102 = vmatpush1.msra.mxu0 0.0
    %103 = vmatprep.subr.mxu0 0.0
    %104 = vmatpush1.msra.mxu0 0.0
    %105 = vmatprep.subr.mxu0 0.0
    %106 = vmatpush1.msra.mxu0 0.0
    %107 = vmatprep.subr.mxu0 0.0
    %108 = vmatpush1.msra.mxu0 0.0
    %109 = vmatprep.subr.mxu0 0.0
    %110 = vmatpush1.msra.mxu0 0.0
    %111 = vmatprep.subr.mxu0 0.0
    %112 = vmatpush1.msra.mxu0 0.0
    %113 = vmatprep.subr.mxu0 0.0
    %114 = vmatpush1.msra.mxu0 0.0
    %115 = vmatprep.subr.mxu0 0.0
    %116 = vmatpush1.msra.mxu0 0.0
    %117 = vmatprep.subr.mxu0 0.0
    %118 = vmatpush1.msra.mxu0 0.0
    %119 = vmatprep.subr.mxu0 0.0
    %120 = vmatpush1.msra.mxu0 0.0
    %121 = vmatprep.subr.mxu0 0.0
    %122 = vmatpush1.msra.mxu0 0.0
    %123 = vmatprep.subr.mxu0 0.0
    %124 = vmatpush1.msra.mxu0 0.0
    %125 = vmatprep.subr.mxu0 0.0
    %126 = vmatpush1.msra.mxu0 0.0
    %127 = vmatprep.subr.mxu0 0.0
    %128 = vmatpush1.msra.mxu0 0.0
    %129 = vmatprep.subr.mxu0 0.0
    %130 = vmatpush1.msra.mxu0 0.0
    %131 = vmatprep.mubr.f32.mxu0 0.0
    %132 = vmatmul.mubr.f32.gmra.mrb[0].mxu0 %v62
    %v133 = vpop.f32.mrb[0].mxu0
    %v134 = vadd.f32 0.0, %v133
    %v135 = vpop.f32.mrb[0].mxu0
    %136 = vmatprep.mubr.f32.mxu0 0.0
    %137 = vmatmul.mubr.f32.gmra.mrb[0].mxu0 %v65
    %v138 = vpop.f32.mrb[0].mxu0
    %v139 = vadd.f32 0.0, %v138
    %v140 = vpop.f32.mrb[0].mxu0
    %141 = vdwg.mxu0
    %v142 = vadd.f32 %v26, %v134
    %v143 = vadd.f32 %v27, %v139
    %vm144 = vcmask 48128
    %145 = vst.msk [vmem:[#allocation2] sm:$0xff] %vm144, %v142
    %vm146 = vcmask 41984
    %147 = vst.msk [vmem:[#allocation2 + $0x8] sm:$0x3] %vm146, %v143
    %v148 = vld [vmem:[#allocation3] sm:$0x1]
    %v149 = vmul.f32 %v22, %v22
    %v150 = vmul.f32 %v23, %v23
    %vm151 = vcmask 80896
    %v152 = vsel %vm151, %v149, 0.0
    %v153 = vsel %vm151, %v150, 0.0
    %v154 = vadd.f32 %v152, %v153
    %155 = vadd.xlane.f32.xlu0 %v154
    %v156 = vpop.xlane.xlu0 %155
    %v157 = vrot.slane %v156, 4
    %v158 = vadd.f32 %v156, %v157
    %v159 = vrot.slane %v158, 2
    %v160 = vadd.f32 %v158, %v159
    %v161 = vrot.slane %v160, 1
    %v162 = vadd.f32 %v160, %v161
    %s163 = vtos %v162
    %v164 = vstv %s163
    %v165 = vadd.f32 %v148, %v164
    %vm166 = vcmask 0
    %167 = vst.msk [vmem:[#allocation3] sm:$0x1] %vm166, %v165
    // Predicated region
    $region14: #{tpu_custom_call.1} parent=1 // pred_check
      %p168 = pneg %p12
    $region15: #{tpu_custom_call.1} parent=1 // pred_check_branch
      %170 = sbr.rel (%p168) target = $region17
    $region16: #{tpu_custom_call.1} parent=1 // pred_region
      %v171 = vld [vmem:[#allocation2] sm:$0xff]
      %v172 = vld [vmem:[#allocation2 + $0x8] sm:$0x3]
      %v173 = vld [vmem:[#allocation3] sm:$0x1]
      %v174 = vadd.f32 %v173, 0.0
      %s175 = vtos %v174
      %v176 = vmul.f32 %v171, %v171
      %v177 = vmul.f32 %v172, %v172
      %v178 = vsel %vm144, %v176, 0.0
      %v179 = vsel %vm146, %v177, 0.0
      %v180 = vadd.f32 %v178, %v179
      %181 = vadd.xlane.f32.xlu0 %v180
      %v182 = vpop.xlane.xlu0 %181
      %v183 = vrot.slane %v182, 4
      %v184 = vadd.f32 %v182, %v183
      %v185 = vrot.slane %v184, 2
      %v186 = vadd.f32 %v184, %v185
      %v187 = vrot.slane %v186, 1
      %v188 = vadd.f32 %v186, %v187
      %s189 = vtos %v188
      %s190 = ssub.f32 %s175, %s189
      %s191 = scalar_lea.smem [#allocation4], 0
      %192 = sst [smem:[%s191]] %s190
    $region17: #{tpu_custom_call.1} parent=1 // pred_fallthru
      _
    // Predicated region
    $region18: #{tpu_custom_call.1} parent=1 // pred_check
      _
    $region19: #{tpu_custom_call.1} parent=1 // pred_check_branch
      %194 = sbr.rel (0) target = $region21
    $region20: #{tpu_custom_call.1} parent=1 // pred_region
      %s196 = ssub.s32 16, 16
      %197 = vsyncadd [#allocation5], %s196
      %200 = dma.smem_to_hbm [#allocation4], 16, %s2, [#allocation5]
    $region21: #{tpu_custom_call.1} parent=1 // pred_fallthru
      _
    // Predicated region
    $region22: #{tpu_custom_call.1} parent=1 // pred_check
      _
    $region23: #{tpu_custom_call.1} parent=1 // pred_check_branch
      %202 = sbr.rel (0) target = $region25
    $region24: #{tpu_custom_call.1} parent=1 // pred_region
      %203 = dma.done [#allocation5], 16
    $region25: #{tpu_custom_call.1} parent=1 // pred_fallthru
      _
    %204 = sfence
    %205 = vsyncpa [#allocation5], 1

</llo_original>
